<compile_context>
chip_gen: v6e
topology: v6e:2x2x1
jax: 0.10.0
libtpu: 0.0.40
codegen_flags: <defaults>
</compile_context>

<pallas_src>
import jax
import jax.numpy as jnp
from jax.experimental import pallas as pl
from jax.experimental.pallas import tpu as pltpu


# ----------------------------------------------------------------------------
# Fused kernel: 1x1 conv + ReLU -> GAP -> logits -> argmax -> CAM -> normalize
# -> separable bilinear resize.  One grid step processes Bt images.
# ----------------------------------------------------------------------------
def _cam_fused_kernel(x_ref, wf_ref, bf_ref, wct_ref, bc_ref,
                      smask_ref, rwt_ref, rh_ref, out_ref):
    # Per-block shapes:
    #   x_ref    : (Cin, Bt*HW)  images, spatial flattened into lanes,
    #                            image i occupies columns [i*HW, (i+1)*HW)
    #   wf_ref   : (Cf, Cin)     1x1-conv weight (pre-transposed)
    #   bf_ref   : (Cf, 1)       1x1-conv bias (column)
    #   wct_ref  : (Cf, NC)      classifier weight (pre-transposed)
    #   bc_ref   : (1, NC)       classifier bias (row)
    #   smask_ref: (H, HW)       row-selection mask: smask[h, j] = (j // W == h)
    #   rwt_ref  : (HW, OW)      row-tiled column interp matrix: row h*W+w = Rw[w]
    #   rh_ref   : (OH, H)       row interpolation matrix
    #   out_ref  : (Bt, OH, OW)  resized, normalized CAMs
    cin = x_ref.shape[0]
    bt = out_ref.shape[0]
    hw = smask_ref.shape[1]
    nc = wct_ref.shape[1]

    x = x_ref[...]                                   # (Cin, Bt*HW)
    wf = wf_ref[...]                                 # (Cf, Cin)
    bf = bf_ref[...]                                 # (Cf, 1)
    wct = wct_ref[...]                               # (Cf, NC)
    bc = bc_ref[...]                                 # (1, NC)
    smask = smask_ref[...]                           # (H, HW)
    rwt = rwt_ref[...]                               # (HW, OW)
    rh = rh_ref[...]                                 # (OH, H)

    # ---- 1x1 conv + bias + ReLU over the whole block --------------------
    if cin <= 8:
        # Tiny contraction: exact-f32 VPU multiply-adds, MXU stays out of the
        # critical path.
        acc = wf[:, 0:1] * x[0:1, :]
        for c in range(1, cin):
            acc = acc + wf[:, c:c + 1] * x[c:c + 1, :]
    else:
        acc = jax.lax.dot_general(wf, x, (((1,), (0,)), ((), ())),
                                  preferred_element_type=jnp.float32)
    feats = jnp.maximum(acc + bf, 0.0)               # (Cf, Bt*HW)

    # Hoisted once per block (JAX does not CSE broadcast_in_dim).
    col_idx = jax.lax.broadcasted_iota(jnp.int32, (1, nc), 1)

    # ---- per-image: logits, argmax, CAM, normalize, resize ---------------
    for i in range(bt):
        f_i = feats[:, i * hw:(i + 1) * hw]                     # (Cf, HW)

        # Global average pool over lanes -> (Cf, 1).
        pooled = jnp.mean(f_i, axis=1, keepdims=True)

        # Logits via VPU multiply + sublane reduce (exact f32, no MXU push).
        logits = jnp.sum(pooled * wct, axis=0, keepdims=True) + bc   # (1, NC)

        # argmax with first-maximal tie-break (matches torch.max).
        mx = jnp.max(logits, axis=1, keepdims=True)
        cls = jnp.min(jnp.where(logits >= mx, col_idx, nc))          # scalar

        # Predicted class's classifier column via lane mask + reduce.
        w_sel = jnp.sum(jnp.where(col_idx == cls, wct, 0.0),
                        axis=1, keepdims=True)                       # (Cf, 1)

        # Weighted channel sum -> lane-dense (1, HW) CAM.
        cam = jnp.sum(f_i * w_sel, axis=0, keepdims=True)
        cam = jnp.maximum(cam, 0.0)

        # ReLU -> subtract min -> divide by (max + 1e-8), folded into one
        # multiply-add pass (the divide is a single scalar op).
        mn = jnp.min(cam)
        inv = 1.0 / ((jnp.max(cam) - mn) + 1e-8)
        cam = (cam - mn) * inv                                       # (1, HW)

        # Separable bilinear resize, no in-kernel reshape:
        #   cam_rows[h, h*W+w] = cam2d[h, w]   (row-select mask, VPU)
        #   tmp  = cam_rows @ Rw_tiled -> (H, OW)     (MXU)
        #   out  = Rh @ tmp            -> (OH, OW)    (MXU, unmasked vst)
        cam_rows = smask * cam                                       # (H, HW)
        tmp = jnp.dot(cam_rows, rwt, preferred_element_type=jnp.float32)
        out_ref[i] = jnp.dot(rh, tmp, preferred_element_type=jnp.float32)


# ----------------------------------------------------------------------------
# Host-side helpers
# ----------------------------------------------------------------------------
def _bilinear_matrices(in_h, in_w, out_h, out_w):
    """Rh (out_h,in_h), Rw (in_w,out_w) s.t. Rh @ img @ Rw == bilinear resize."""
    # Resize is linear, so applying it to identity basis vectors gives the
    # exact per-axis interpolation matrices used by jax.image.resize.
    rh = jax.image.resize(jnp.eye(in_h, dtype=jnp.float32), (out_h, in_h),
                          method="bilinear")
    rw = jax.image.resize(jnp.eye(in_w, dtype=jnp.float32), (in_w, out_w),
                          method="bilinear")
    return rh, rw


def compute_cams_fused(x_nchw, w_feat, b_feat, w_cls, b_cls, out_size=256):
    """Returns resized, normalized CAMs of shape (B, out_size, out_size)."""
    B, Cin, H, W = x_nchw.shape
    HW = H * W
    Cf = w_feat.shape[1]
    NC = w_cls.shape[0]
    OH = OW = out_size

    # Grid of 2 parallel steps when the batch splits evenly (uses both
    # TensorCores on v7x; costs one extra ~0.35us step on single-TC v5e/v6e),
    # otherwise a single step with the whole batch.
    num_blocks = 2 if (B % 2 == 0 and B >= 2) else 1
    Bt = B // num_blocks

    # (Cin, B*HW): one wide contraction per block; each image's spatial slab
    # is a contiguous, 128-aligned lane range.
    x_flat = jnp.transpose(x_nchw.reshape(B, Cin, HW), (1, 0, 2)).reshape(Cin, B * HW)
    wf_t = jnp.transpose(w_feat)                      # (Cf, Cin)
    bf = b_feat.reshape(Cf, 1)
    wct = jnp.transpose(w_cls)                        # (Cf, NC)
    bc = b_cls.reshape(1, NC)

    # Fused-resize operands (grid-invariant).
    rh, rw = _bilinear_matrices(H, W, OH, OW)         # (OH, H), (W, OW)
    rw_tiled = jnp.tile(rw, (H, 1))                   # (HW, OW): row h*W+w = Rw[w]
    row_ids = jnp.arange(HW, dtype=jnp.int32) // W
    smask = (row_ids[None, :] ==
             jnp.arange(H, dtype=jnp.int32)[:, None]).astype(jnp.float32)  # (H, HW)

    flops = int(B * (2 * Cin * Cf * HW        # 1x1 conv
                     + 4 * Cf * HW            # relu + GAP + weighted CAM sum
                     + 4 * Cf * NC            # logits + class select
                     + 8 * HW                 # normalization + row mask
                     + 2 * H * HW * OW        # cam_rows @ Rw_tiled
                     + 2 * OH * H * OW))      # Rh @ tmp
    bytes_accessed = int(4 * (B * Cin * HW + Cf * (Cin + 1 + NC) + NC
                              + H * HW + HW * OW + OH * H
                              + B * OH * OW))

    return pl.pallas_call(
        _cam_fused_kernel,
        out_shape=jax.ShapeDtypeStruct((B, OH, OW), jnp.float32),
        grid_spec=pltpu.PrefetchScalarGridSpec(
            num_scalar_prefetch=0,
            grid=(num_blocks,),
            in_specs=[
                pl.BlockSpec((Cin, Bt * HW), lambda b: (0, b)),
                pl.BlockSpec((Cf, Cin), lambda b: (0, 0)),
                pl.BlockSpec((Cf, 1), lambda b: (0, 0)),
                pl.BlockSpec((Cf, NC), lambda b: (0, 0)),
                pl.BlockSpec((1, NC), lambda b: (0, 0)),
                pl.BlockSpec((H, HW), lambda b: (0, 0)),
                pl.BlockSpec((HW, OW), lambda b: (0, 0)),
                pl.BlockSpec((OH, H), lambda b: (0, 0)),
            ],
            out_specs=pl.BlockSpec((Bt, OH, OW), lambda b: (b, 0, 0)),
        ),
        compiler_params=pltpu.CompilerParams(
            dimension_semantics=("parallel",)),
        cost_estimate=pl.CostEstimate(
            flops=flops, transcendentals=0, bytes_accessed=bytes_accessed),
    )(x_flat, wf_t, bf, wct, bc, smask, rw_tiled, rh)


# ----------------------------------------------------------------------------
# Full BasicCAMWrapper.forward (target_class=None path).
# ----------------------------------------------------------------------------
def basic_cam_wrapper_forward(x_nchw, params, out_size=256):
    # TODO(synk): `resize_images` is undefined in the reference source; assume
    # bilinear (half-pixel centers / align_corners=False) to (out_size, out_size).
    return compute_cams_fused(x_nchw, params["w_feat"], params["b_feat"],
                              params["w_cls"], params["b_cls"],
                              out_size=out_size)


# Pure-JAX reference for a sanity check (f32 precision everywhere).
def _reference(x_nchw, params, out_size=256):
    hp = jax.lax.Precision.HIGHEST
    x = jnp.transpose(x_nchw, (0, 2, 3, 1))                        # NHWC
    f = jnp.maximum(
        jnp.einsum("bhwc,cf->bhwf", x, params["w_feat"], precision=hp)
        + params["b_feat"], 0.0)
    pooled = f.mean(axis=(1, 2))
    logits = jnp.einsum("bf,cf->bc", pooled, params["w_cls"],
                        precision=hp) + params["b_cls"]
    cls = jnp.argmax(logits, axis=1)
    w_sel = params["w_cls"][cls]                                    # (B, Cf)
    cam = jnp.einsum("bhwf,bf->bhw", f, w_sel, precision=hp)
    cam = jnp.maximum(cam, 0.0)
    cam = cam - cam.min(axis=(1, 2), keepdims=True)
    cam = cam / (cam.max(axis=(1, 2), keepdims=True) + 1e-8)
    return jax.image.resize(cam, (cam.shape[0], out_size, out_size),
                            method="bilinear")


if __name__ == "__main__":
    B, Cin, H, W = 2, 3, 16, 16     # input images, NCHW like PyTorch
    Cf, NC = 8, 10                  # feature channels, num classes

    key = jax.random.PRNGKey(0)
    kx, kwf, kbf, kwc, kbc = jax.random.split(key, 5)
    x = jax.random.normal(kx, (B, Cin, H, W), dtype=jnp.float32)
    params = {
        "w_feat": 0.1 * jax.random.normal(kwf, (Cin, Cf), dtype=jnp.float32),
        "b_feat": 0.1 * jax.random.normal(kbf, (Cf,), dtype=jnp.float32),
        "w_cls": 0.1 * jax.random.normal(kwc, (NC, Cf), dtype=jnp.float32),
        "b_cls": 0.1 * jax.random.normal(kbc, (NC,), dtype=jnp.float32),
    }

    out = jax.block_until_ready(basic_cam_wrapper_forward(x, params))
    assert out.shape == (B, 256, 256), out.shape

    ref = jax.block_until_ready(_reference(x, params))
    max_diff = float(jnp.max(jnp.abs(out - ref)))
    assert jnp.allclose(out, ref, rtol=5e-3, atol=5e-3), \
        f"mismatch vs reference, max abs diff {max_diff}"

    print("KERNEL_OK")
</pallas_src>

<mosaic_0001>
module attributes {stable_mosaic.version = 11 : i64} {
  func.func @_cam_fused_kernel(%arg0: i32, %arg1: memref<3x256xf32, #tpu.memory_space<vmem>>, %arg2: memref<8x3xf32, #tpu.memory_space<vmem>>, %arg3: memref<8x1xf32, #tpu.memory_space<vmem>>, %arg4: memref<8x10xf32, #tpu.memory_space<vmem>>, %arg5: memref<1x10xf32, #tpu.memory_space<vmem>>, %arg6: memref<16x256xf32, #tpu.memory_space<vmem>>, %arg7: memref<256x256xf32, #tpu.memory_space<vmem>>, %arg8: memref<256x16xf32, #tpu.memory_space<vmem>>, %arg9: memref<1x256x256xf32, #tpu.memory_space<vmem>>) attributes {dimension_semantics = [#tpu.dimension_semantics<parallel>], iteration_bounds = array<i64: 2>, scalar_prefetch = 0 : i64, scratch_operands = 0 : i64, tpu.core_type = #tpu.core_type<tc>, window_params = [{transform_indices = @transform_0, window_bounds = array<i64: 3, 256>}, {pipeline_mode = #tpu.pipeline_mode<synchronous>, transform_indices = @transform_1, window_bounds = array<i64: 8, 3>}, {pipeline_mode = #tpu.pipeline_mode<synchronous>, transform_indices = @transform_2, window_bounds = array<i64: 8, 1>}, {pipeline_mode = #tpu.pipeline_mode<synchronous>, transform_indices = @transform_3, window_bounds = array<i64: 8, 10>}, {pipeline_mode = #tpu.pipeline_mode<synchronous>, transform_indices = @transform_4, window_bounds = array<i64: 1, 10>}, {pipeline_mode = #tpu.pipeline_mode<synchronous>, transform_indices = @transform_5, window_bounds = array<i64: 16, 256>}, {pipeline_mode = #tpu.pipeline_mode<synchronous>, transform_indices = @transform_6, window_bounds = array<i64: 256, 256>}, {pipeline_mode = #tpu.pipeline_mode<synchronous>, transform_indices = @transform_7, window_bounds = array<i64: 256, 16>}, {transform_indices = @transform_8, window_bounds = array<i64: 1, 256, 256>}]} {
    %c0 = arith.constant 0 : index
    %c0_0 = arith.constant 0 : index
    %0 = vector.load %arg1[%c0, %c0_0] : memref<3x256xf32, #tpu.memory_space<vmem>>, vector<3x256xf32>
    %c0_1 = arith.constant 0 : index
    %c0_2 = arith.constant 0 : index
    %1 = vector.load %arg2[%c0_1, %c0_2] : memref<8x3xf32, #tpu.memory_space<vmem>>, vector<8x3xf32>
    %c0_3 = arith.constant 0 : index
    %c0_4 = arith.constant 0 : index
    %2 = vector.load %arg3[%c0_3, %c0_4] : memref<8x1xf32, #tpu.memory_space<vmem>>, vector<8x1xf32>
    %c0_5 = arith.constant 0 : index
    %c0_6 = arith.constant 0 : index
    %3 = vector.load %arg4[%c0_5, %c0_6] : memref<8x10xf32, #tpu.memory_space<vmem>>, vector<8x10xf32>
    %c0_7 = arith.constant 0 : index
    %c0_8 = arith.constant 0 : index
    %4 = vector.load %arg5[%c0_7, %c0_8] : memref<1x10xf32, #tpu.memory_space<vmem>>, vector<1x10xf32>
    %c0_9 = arith.constant 0 : index
    %c0_10 = arith.constant 0 : index
    %5 = vector.load %arg6[%c0_9, %c0_10] : memref<16x256xf32, #tpu.memory_space<vmem>>, vector<16x256xf32>
    %c0_11 = arith.constant 0 : index
    %c0_12 = arith.constant 0 : index
    %6 = vector.load %arg7[%c0_11, %c0_12] : memref<256x256xf32, #tpu.memory_space<vmem>>, vector<256x256xf32>
    %c0_13 = arith.constant 0 : index
    %c0_14 = arith.constant 0 : index
    %7 = vector.load %arg8[%c0_13, %c0_14] : memref<256x16xf32, #tpu.memory_space<vmem>>, vector<256x16xf32>
    %8 = vector.extract_strided_slice %1 {offsets = [0, 0], sizes = [8, 1], strides = [1, 1]} : vector<8x3xf32> to vector<8x1xf32>
    %9 = vector.extract_strided_slice %0 {offsets = [0, 0], sizes = [1, 256], strides = [1, 1]} : vector<3x256xf32> to vector<1x256xf32>
    %10 = vector.broadcast %8 : vector<8x1xf32> to vector<8x256xf32>
    %11 = vector.broadcast %9 : vector<1x256xf32> to vector<8x256xf32>
    %12 = arith.mulf %10, %11 : vector<8x256xf32>
    %13 = vector.extract_strided_slice %1 {offsets = [0, 1], sizes = [8, 1], strides = [1, 1]} : vector<8x3xf32> to vector<8x1xf32>
    %14 = vector.extract_strided_slice %0 {offsets = [1, 0], sizes = [1, 256], strides = [1, 1]} : vector<3x256xf32> to vector<1x256xf32>
    %15 = vector.broadcast %13 : vector<8x1xf32> to vector<8x256xf32>
    %16 = vector.broadcast %14 : vector<1x256xf32> to vector<8x256xf32>
    %17 = arith.mulf %15, %16 : vector<8x256xf32>
    %18 = arith.addf %12, %17 : vector<8x256xf32>
    %19 = vector.extract_strided_slice %1 {offsets = [0, 2], sizes = [8, 1], strides = [1, 1]} : vector<8x3xf32> to vector<8x1xf32>
    %20 = vector.extract_strided_slice %0 {offsets = [2, 0], sizes = [1, 256], strides = [1, 1]} : vector<3x256xf32> to vector<1x256xf32>
    %21 = vector.broadcast %19 : vector<8x1xf32> to vector<8x256xf32>
    %22 = vector.broadcast %20 : vector<1x256xf32> to vector<8x256xf32>
    %23 = arith.mulf %21, %22 : vector<8x256xf32>
    %24 = arith.addf %18, %23 : vector<8x256xf32>
    %25 = vector.broadcast %2 : vector<8x1xf32> to vector<8x256xf32>
    %26 = arith.addf %24, %25 : vector<8x256xf32>
    %cst = arith.constant 0.000000e+00 : f32
    %27 = vector.broadcast %cst : f32 to vector<8x256xf32>
    %28 = arith.maximumf %26, %27 : vector<8x256xf32>
    %29 = tpu.iota {dimensions = array<i32: 1>} : vector<1x10xi32>
    %cst_15 = arith.constant dense<0.000000e+00> : vector<8xf32>
    %30 = vector.multi_reduction <add>, %28, %cst_15 [1] : vector<8x256xf32> to vector<8xf32>
    %31 = vector.shape_cast %30 : vector<8xf32> to vector<8x1xf32>
    %cst_16 = arith.constant 2.560000e+02 : f32
    %32 = vector.broadcast %cst_16 : f32 to vector<8x1xf32>
    %33 = arith.divf %31, %32 : vector<8x1xf32>
    %34 = vector.broadcast %33 : vector<8x1xf32> to vector<8x10xf32>
    %35 = arith.mulf %34, %3 : vector<8x10xf32>
    %cst_17 = arith.constant dense<0.000000e+00> : vector<10xf32>
    %36 = vector.multi_reduction <add>, %35, %cst_17 [0] : vector<8x10xf32> to vector<10xf32>
    %37 = vector.shape_cast %36 : vector<10xf32> to vector<1x10xf32>
    %38 = arith.addf %37, %4 : vector<1x10xf32>
    %cst_18 = arith.constant dense<0xFF800000> : vector<1xf32>
    %39 = vector.multi_reduction <maximumf>, %38, %cst_18 [1] : vector<1x10xf32> to vector<1xf32>
    %40 = vector.shape_cast %39 : vector<1xf32> to vector<1x1xf32>
    %41 = vector.broadcast %40 : vector<1x1xf32> to vector<1x10xf32>
    %42 = arith.cmpf oge, %38, %41 : vector<1x10xf32>
    %c10_i32 = arith.constant 10 : i32
    %43 = vector.broadcast %c10_i32 : i32 to vector<1x10xi32>
    %44 = arith.select %42, %29, %43 : vector<1x10xi1>, vector<1x10xi32>
    %45 = vector.shape_cast %44 : vector<1x10xi32> to vector<1x1x10xi32>
    %cst_19 = arith.constant dense<2147483647> : vector<1xi32>
    %46 = vector.multi_reduction <minsi>, %45, %cst_19 [1, 2] : vector<1x1x10xi32> to vector<1xi32>
    %47 = vector.shape_cast %46 : vector<1xi32> to vector<1x1x1xi32>
    %48 = vector.extract %47[0, 0, 0] : i32 from vector<1x1x1xi32>
    %49 = vector.broadcast %48 : i32 to vector<1x10xi32>
    %50 = arith.cmpi eq, %29, %49 : vector<1x10xi32>
    %cst_20 = arith.constant 0.000000e+00 : f32
    %51 = vector.shape_cast %50 : vector<1x10xi1> to vector<1x10xi1>
    %52 = vector.broadcast %51 : vector<1x10xi1> to vector<8x10xi1>
    %53 = vector.broadcast %cst_20 : f32 to vector<8x10xf32>
    %54 = arith.select %52, %3, %53 : vector<8x10xi1>, vector<8x10xf32>
    %cst_21 = arith.constant dense<0.000000e+00> : vector<8xf32>
    %55 = vector.multi_reduction <add>, %54, %cst_21 [1] : vector<8x10xf32> to vector<8xf32>
    %56 = vector.shape_cast %55 : vector<8xf32> to vector<8x1xf32>
    %57 = vector.broadcast %56 : vector<8x1xf32> to vector<8x256xf32>
    %58 = arith.mulf %28, %57 : vector<8x256xf32>
    %cst_22 = arith.constant dense<0.000000e+00> : vector<256xf32>
    %59 = vector.multi_reduction <add>, %58, %cst_22 [0] : vector<8x256xf32> to vector<256xf32>
    %60 = vector.shape_cast %59 : vector<256xf32> to vector<1x256xf32>
    %cst_23 = arith.constant 0.000000e+00 : f32
    %61 = vector.broadcast %cst_23 : f32 to vector<1x256xf32>
    %62 = arith.maximumf %60, %61 : vector<1x256xf32>
    %63 = vector.shape_cast %62 : vector<1x256xf32> to vector<1x1x256xf32>
    %cst_24 = arith.constant dense<0x7F800000> : vector<1xf32>
    %64 = vector.multi_reduction <minimumf>, %63, %cst_24 [1, 2] : vector<1x1x256xf32> to vector<1xf32>
    %65 = vector.shape_cast %64 : vector<1xf32> to vector<1x1x1xf32>
    %66 = vector.extract %65[0, 0, 0] : f32 from vector<1x1x1xf32>
    %67 = vector.shape_cast %62 : vector<1x256xf32> to vector<1x1x256xf32>
    %cst_25 = arith.constant dense<0xFF800000> : vector<1xf32>
    %68 = vector.multi_reduction <maximumf>, %67, %cst_25 [1, 2] : vector<1x1x256xf32> to vector<1xf32>
    %69 = vector.shape_cast %68 : vector<1xf32> to vector<1x1x1xf32>
    %70 = vector.extract %69[0, 0, 0] : f32 from vector<1x1x1xf32>
    %71 = arith.subf %70, %66 : f32
    %cst_26 = arith.constant 9.99999993E-9 : f32
    %72 = arith.addf %71, %cst_26 : f32
    %cst_27 = arith.constant 1.000000e+00 : f32
    %73 = arith.divf %cst_27, %72 : f32
    %74 = vector.broadcast %66 : f32 to vector<1x256xf32>
    %75 = arith.subf %62, %74 : vector<1x256xf32>
    %76 = vector.broadcast %73 : f32 to vector<1x256xf32>
    %77 = arith.mulf %75, %76 : vector<1x256xf32>
    %78 = vector.broadcast %77 : vector<1x256xf32> to vector<16x256xf32>
    %79 = arith.mulf %5, %78 : vector<16x256xf32>
    %cst_28 = arith.constant dense<0.000000e+00> : vector<16x256xf32>
    %80 = tpu.matmul %79, %6, %cst_28 {dimension_numbers = #tpu.dot_dimension_numbers<[1], [0], [0], [1], [0, 0, 1, 1], [], []>} : vector<16x256xf32>, vector<256x256xf32>, vector<16x256xf32> -> vector<16x256xf32>
    %cst_29 = arith.constant dense<0.000000e+00> : vector<256x256xf32>
    %81 = tpu.matmul %7, %80, %cst_29 {dimension_numbers = #tpu.dot_dimension_numbers<[1], [0], [0], [1], [0, 0, 1, 1], [], []>} : vector<256x16xf32>, vector<16x256xf32>, vector<256x256xf32> -> vector<256x256xf32>
    %c0_30 = arith.constant 0 : index
    %c0_31 = arith.constant 0 : index
    %c0_32 = arith.constant 0 : index
    %82 = vector.load %arg9[%c0_30, %c0_31, %c0_32] : memref<1x256x256xf32, #tpu.memory_space<vmem>>, vector<1x256x256xf32>
    %83 = vector.shape_cast %82 : vector<1x256x256xf32> to vector<256x256xf32>
    %84 = vector.shape_cast %81 : vector<256x256xf32> to vector<1x256x256xf32>
    tpu.vector_store %arg9[%c0_30, %c0_31, %c0_32], %84 {strides = array<i32>} : memref<1x256x256xf32, #tpu.memory_space<vmem>>, vector<1x256x256xf32>,
    return
  }
  func.func @transform_0(%arg0: i32) -> (i32, i32) {
    %c0_i32 = arith.constant 0 : i32
    %c0_i32_0 = arith.constant 0 : i32
    return %c0_i32, %arg0 : i32, i32
  }
  func.func @transform_1(%arg0: i32) -> (i32, i32) {
    %c0_i32 = arith.constant 0 : i32
    %c0_i32_0 = arith.constant 0 : i32
    %c0_i32_1 = arith.constant 0 : i32
    return %c0_i32, %c0_i32_0 : i32, i32
  }
  func.func @transform_2(%arg0: i32) -> (i32, i32) {
    %c0_i32 = arith.constant 0 : i32
    %c0_i32_0 = arith.constant 0 : i32
    %c0_i32_1 = arith.constant 0 : i32
    return %c0_i32, %c0_i32_0 : i32, i32
  }
  func.func @transform_3(%arg0: i32) -> (i32, i32) {
    %c0_i32 = arith.constant 0 : i32
    %c0_i32_0 = arith.constant 0 : i32
    %c0_i32_1 = arith.constant 0 : i32
    return %c0_i32, %c0_i32_0 : i32, i32
  }
  func.func @transform_4(%arg0: i32) -> (i32, i32) {
    %c0_i32 = arith.constant 0 : i32
    %c0_i32_0 = arith.constant 0 : i32
    %c0_i32_1 = arith.constant 0 : i32
    return %c0_i32, %c0_i32_0 : i32, i32
  }
  func.func @transform_5(%arg0: i32) -> (i32, i32) {
    %c0_i32 = arith.constant 0 : i32
    %c0_i32_0 = arith.constant 0 : i32
    %c0_i32_1 = arith.constant 0 : i32
    return %c0_i32, %c0_i32_0 : i32, i32
  }
  func.func @transform_6(%arg0: i32) -> (i32, i32) {
    %c0_i32 = arith.constant 0 : i32
    %c0_i32_0 = arith.constant 0 : i32
    %c0_i32_1 = arith.constant 0 : i32
    return %c0_i32, %c0_i32_0 : i32, i32
  }
  func.func @transform_7(%arg0: i32) -> (i32, i32) {
    %c0_i32 = arith.constant 0 : i32
    %c0_i32_0 = arith.constant 0 : i32
    %c0_i32_1 = arith.constant 0 : i32
    return %c0_i32, %c0_i32_0 : i32, i32
  }
  func.func @transform_8(%arg0: i32) -> (i32, i32, i32) {
    %c0_i32 = arith.constant 0 : i32
    %c0_i32_0 = arith.constant 0 : i32
    %c0_i32_1 = arith.constant 0 : i32
    return %arg0, %c0_i32, %c0_i32_0 : i32, i32, i32
  }
}

</mosaic_0001>

<llo_original>
// kernel: tpu_custom_call.1
$region0: #{tpu_custom_call.1}
  #allocation0 [shape = 'u32[]', space=smem, size = 0x4, offset = 0x4, fixed_abs, tag = 'smem constant byte address 0x4 - core index']
  #allocation1 [shape = 'u32[144,128]{1,0:T(1,128)}', space=vmem, size = 0x12000, scoped, tag = 'internal scratch']
  %s0 = inlined_call_operand.vmem [shape: f32[3,512], index: 0, kind: input, shape index: {}]
  %s1 = inlined_call_operand.vmem [shape: f32[8,3], index: 1, kind: input, shape index: {}]
  %s2 = inlined_call_operand.vmem [shape: f32[8,1], index: 2, kind: input, shape index: {}]
  %s3 = inlined_call_operand.vmem [shape: f32[8,10], index: 3, kind: input, shape index: {}]
  %s4 = inlined_call_operand.vmem [shape: f32[1,10], index: 4, kind: input, shape index: {}]
  %s5 = inlined_call_operand.vmem [shape: f32[16,256], index: 5, kind: input, shape index: {}]
  %s6 = inlined_call_operand.hbm [shape: f32[256,256], index: 6, kind: input, shape index: {}]
  %s7 = inlined_call_operand.vmem [shape: f32[256,16], index: 7, kind: input, shape index: {}]
  %s8 = inlined_call_operand.hbm [shape: f32[2,256,256], index: 8, kind: output, shape index: {}]
  %s9 = sld [smem:[#allocation0]]
  $region69: #{tpu_custom_call.1} parent=0
    _
  %s11 = ssub.s32 1, %s9
  %s12 = scalar_select 0, %s11, %s9
  $region1: #{tpu_custom_call.1} parent=0
    #allocation2 [shape = 'u8[262144]{0}', space=vmem, size = 0x40000, scoped, tag = 'input window, operand 6, single buffered']
    #allocation3 [shape = 's32[2]{0}', space=sflag, size = 0x8, scoped, tag = 'scoped memory for tpu_custom_call.1']
    #allocation4 [shape = 's32[2]{0}', space=sflag, size = 0x8, scoped, tag = 'scoped memory for tpu_custom_call.1']
    #allocation5 [shape = 'u8[524288]{0}', space=vmem, size = 0x80000, scoped, tag = 'output window, operand 0']
    %13 = vsyncpa [#allocation3], 0
    %14 = vsyncpa [#allocation4], 0
    %s15 = scalar_lea.sflag [#allocation4], 1
    %16 = vsyncpa %s15, 0
    loop: start=0, step=1, limit=4
    $region2: #{tpu_custom_call.1} parent=1 // loop_pre_header
      _
    $region3: #{tpu_custom_call.1} parent=1 // loop_header
      %s18 = sphi 0, %s22
      %p19 = scmp.ge.s32.totalorder %s18, 4
      %s28 = sphi 0, %s30
      %s31 = sphi 0, %s28
      %s32 = sphi 0, %s31
      %s48 = sphi 0, %s32
      %s52 = sphi 0, %s52
      %s54 = sphi 0, %s52
      %s55 = sphi 0, %s54
      %s69 = sphi 0, %s55
      %s73 = sphi 0, %s73
      %s75 = sphi 0, %s73
      %s76 = sphi 0, %s75
      %s90 = sphi 0, %s76
      %s94 = sphi 0, %s94
      %s96 = sphi 0, %s94
      %s97 = sphi 0, %s96
      %s111 = sphi 0, %s97
      %s115 = sphi 0, %s115
      %s117 = sphi 0, %s115
      %s118 = sphi 0, %s117
      %s132 = sphi 0, %s118
      %s136 = sphi 0, %s136
      %s138 = sphi 0, %s136
      %s139 = sphi 0, %s138
      %s153 = sphi 0, %s139
      %s157 = sphi 0, %s157
      %s159 = sphi 0, %s157
      %s160 = sphi 0, %s159
      %s174 = sphi 0, %s160
      %s178 = sphi 0, %s178
      %s180 = sphi 0, %s178
      %s181 = sphi 0, %s180
      %s195 = sphi 0, %s181
      %s201 = sphi 0, %s203
      %s204 = sphi 0, %s201
      %s205 = sphi 0, %s204
      %s221 = sphi 0, %s205
    $region4: #{tpu_custom_call.1} parent=1 // loop_header_branch
      %21 = sbr.rel (%p19) target = $region8
    $region5: #{tpu_custom_call.1} parent=1 // loop_body
      %s23 = ssub.s32 %s18, 1
      %s24 = ssub.s32 %s18, 2
      %s25 = sadd.s32 %s18, 1
      %s26 = ssub.s32 %s18, %s25
      %p27 = scmp.eq.s32.totalorder %s26, 0
      %s29 = sadd.s32 %s28, 1
      %s30 = scalar_select %p27, %s28, %s29
      %p33 = pneg %p27
      %p34 = scmp.eq.s32.totalorder %s18, 1
      %p35 = por %p33, %p34
      %p36 = scmp.ne.s32.totalorder %s28, %s31
      %p37 = scmp.eq.s32.totalorder %s18, 0
      %p38 = por %p36, %p37
      %p39 = scmp.ne.s32.totalorder %s28, %s31
      %p40 = scmp.eq.s32.totalorder %s23, 1
      %p41 = por %p39, %p40
      %p42 = scmp.ne.s32.totalorder %s31, %s32
      %p43 = scmp.eq.s32.totalorder %s23, 0
      %p44 = por %p42, %p43
      %p45 = scmp.ne.s32.totalorder %s31, %s32
      %p46 = scmp.eq.s32.totalorder %s24, 1
      %p47 = por %p45, %p46
      %p49 = scmp.ne.s32.totalorder %s32, %s48
      %p50 = scmp.eq.s32.totalorder %s24, 0
      %p51 = por %p49, %p50
      %s53 = sadd.s32 %s52, 1
      %p56 = scmp.eq.s32.totalorder %s18, 1
      %p57 = scmp.ne.s32.totalorder %s52, %s54
      %p58 = scmp.eq.s32.totalorder %s18, 0
      %p59 = por %p57, %p58
      %p60 = scmp.ne.s32.totalorder %s52, %s54
      %p61 = scmp.eq.s32.totalorder %s23, 1
      %p62 = por %p60, %p61
      %p63 = scmp.ne.s32.totalorder %s54, %s55
      %p64 = scmp.eq.s32.totalorder %s23, 0
      %p65 = por %p63, %p64
      %p66 = scmp.ne.s32.totalorder %s54, %s55
      %p67 = scmp.eq.s32.totalorder %s24, 1
      %p68 = por %p66, %p67
      %p70 = scmp.ne.s32.totalorder %s55, %s69
      %p71 = scmp.eq.s32.totalorder %s24, 0
      %p72 = por %p70, %p71
      %s74 = sadd.s32 %s73, 1
      %p77 = scmp.eq.s32.totalorder %s18, 1
      %p78 = scmp.ne.s32.totalorder %s73, %s75
      %p79 = scmp.eq.s32.totalorder %s18, 0
      %p80 = por %p78, %p79
      %p81 = scmp.ne.s32.totalorder %s73, %s75
      %p82 = scmp.eq.s32.totalorder %s23, 1
      %p83 = por %p81, %p82
      %p84 = scmp.ne.s32.totalorder %s75, %s76
      %p85 = scmp.eq.s32.totalorder %s23, 0
      %p86 = por %p84, %p85
      %p87 = scmp.ne.s32.totalorder %s75, %s76
      %p88 = scmp.eq.s32.totalorder %s24, 1
      %p89 = por %p87, %p88
      %p91 = scmp.ne.s32.totalorder %s76, %s90
      %p92 = scmp.eq.s32.totalorder %s24, 0
      %p93 = por %p91, %p92
      %s95 = sadd.s32 %s94, 1
      %p98 = scmp.eq.s32.totalorder %s18, 1
      %p99 = scmp.ne.s32.totalorder %s94, %s96
      %p100 = scmp.eq.s32.totalorder %s18, 0
      %p101 = por %p99, %p100
      %p102 = scmp.ne.s32.totalorder %s94, %s96
      %p103 = scmp.eq.s32.totalorder %s23, 1
      %p104 = por %p102, %p103
      %p105 = scmp.ne.s32.totalorder %s96, %s97
      %p106 = scmp.eq.s32.totalorder %s23, 0
      %p107 = por %p105, %p106
      %p108 = scmp.ne.s32.totalorder %s96, %s97
      %p109 = scmp.eq.s32.totalorder %s24, 1
      %p110 = por %p108, %p109
      %p112 = scmp.ne.s32.totalorder %s97, %s111
      %p113 = scmp.eq.s32.totalorder %s24, 0
      %p114 = por %p112, %p113
      %s116 = sadd.s32 %s115, 1
      %p119 = scmp.eq.s32.totalorder %s18, 1
      %p120 = scmp.ne.s32.totalorder %s115, %s117
      %p121 = scmp.eq.s32.totalorder %s18, 0
      %p122 = por %p120, %p121
      %p123 = scmp.ne.s32.totalorder %s115, %s117
      %p124 = scmp.eq.s32.totalorder %s23, 1
      %p125 = por %p123, %p124
      %p126 = scmp.ne.s32.totalorder %s117, %s118
      %p127 = scmp.eq.s32.totalorder %s23, 0
      %p128 = por %p126, %p127
      %p129 = scmp.ne.s32.totalorder %s117, %s118
      %p130 = scmp.eq.s32.totalorder %s24, 1
      %p131 = por %p129, %p130
      %p133 = scmp.ne.s32.totalorder %s118, %s132
      %p134 = scmp.eq.s32.totalorder %s24, 0
      %p135 = por %p133, %p134
      %s137 = sadd.s32 %s136, 1
      %p140 = scmp.eq.s32.totalorder %s18, 1
      %p141 = scmp.ne.s32.totalorder %s136, %s138
      %p142 = scmp.eq.s32.totalorder %s18, 0
      %p143 = por %p141, %p142
      %p144 = scmp.ne.s32.totalorder %s136, %s138
      %p145 = scmp.eq.s32.totalorder %s23, 1
      %p146 = por %p144, %p145
      %p147 = scmp.ne.s32.totalorder %s138, %s139
      %p148 = scmp.eq.s32.totalorder %s23, 0
      %p149 = por %p147, %p148
      %p150 = scmp.ne.s32.totalorder %s138, %s139
      %p151 = scmp.eq.s32.totalorder %s24, 1
      %p152 = por %p150, %p151
      %p154 = scmp.ne.s32.totalorder %s139, %s153
      %p155 = scmp.eq.s32.totalorder %s24, 0
      %p156 = por %p154, %p155
      %s158 = sadd.s32 %s157, 1
      %p161 = scmp.eq.s32.totalorder %s18, 1
      %p162 = scmp.ne.s32.totalorder %s157, %s159
      %p163 = scmp.eq.s32.totalorder %s18, 0
      %p164 = por %p162, %p163
      %p165 = scmp.ne.s32.totalorder %s157, %s159
      %p166 = scmp.eq.s32.totalorder %s23, 1
      %p167 = por %p165, %p166
      %p168 = scmp.ne.s32.totalorder %s159, %s160
      %p169 = scmp.eq.s32.totalorder %s23, 0
      %p170 = por %p168, %p169
      %p171 = scmp.ne.s32.totalorder %s159, %s160
      %p172 = scmp.eq.s32.totalorder %s24, 1
      %p173 = por %p171, %p172
      %p175 = scmp.ne.s32.totalorder %s160, %s174
      %p176 = scmp.eq.s32.totalorder %s24, 0
      %p177 = por %p175, %p176
      %s179 = sadd.s32 %s178, 1
      %p182 = scmp.eq.s32.totalorder %s18, 1
      %p183 = scmp.ne.s32.totalorder %s178, %s180
      %p184 = scmp.eq.s32.totalorder %s18, 0
      %p185 = por %p183, %p184
      %p186 = scmp.ne.s32.totalorder %s178, %s180
      %p187 = scmp.eq.s32.totalorder %s23, 1
      %p188 = por %p186, %p187
      %p189 = scmp.ne.s32.totalorder %s180, %s181
      %p190 = scmp.eq.s32.totalorder %s23, 0
      %p191 = por %p189, %p190
      %p192 = scmp.ne.s32.totalorder %s180, %s181
      %p193 = scmp.eq.s32.totalorder %s24, 1
      %p194 = por %p192, %p193
      %p196 = scmp.ne.s32.totalorder %s181, %s195
      %p197 = scmp.eq.s32.totalorder %s24, 0
      %p198 = por %p196, %p197
      %s199 = ssub.s32 %s18, %s25
      %p200 = scmp.eq.s32.totalorder %s199, 0
      %s202 = sadd.s32 %s201, 1
      %s203 = scalar_select %p200, %s201, %s202
      %p206 = pneg %p200
      %p207 = scmp.eq.s32.totalorder %s18, 1
      %p208 = por %p206, %p207
      %p209 = scmp.ne.s32.totalorder %s201, %s204
      %p210 = scmp.eq.s32.totalorder %s18, 0
      %p211 = por %p209, %p210
      %p212 = scmp.ne.s32.totalorder %s201, %s204
      %p213 = scmp.eq.s32.totalorder %s23, 1
      %p214 = por %p212, %p213
      %p215 = scmp.ne.s32.totalorder %s204, %s205
      %p216 = scmp.eq.s32.totalorder %s23, 0
      %p217 = por %p215, %p216
      %p218 = scmp.ne.s32.totalorder %s204, %s205
      %p219 = scmp.eq.s32.totalorder %s24, 1
      %p220 = por %p218, %p219
      %p222 = scmp.ne.s32.totalorder %s205, %s221
      %p223 = scmp.eq.s32.totalorder %s24, 0
      %p224 = por %p222, %p223
      %p225 = scmp.le.s32.totalorder 1, %s18
      %p226 = scmp.lt.s32.totalorder %s18, 3
      %p227 = pnand %p225, %p226
      %p228 = pneg %p227
      // Predicated region
      $region9: #{tpu_custom_call.1} parent=5 // pred_check
        _
      $region10: #{tpu_custom_call.1} parent=5 // pred_check_branch
        %230 = sbr.rel (%p227) target = $region12
      $region11: #{tpu_custom_call.1} parent=5 // pred_region
        %s231 = ssub.s32 %s18, 1
        // Predicated region
        $region13: #{tpu_custom_call.1} parent=11 // pred_check
          %p232 = pneg %p65
        $region14: #{tpu_custom_call.1} parent=11 // pred_check_branch
          %234 = sbr.rel (%p232) target = $region16
        $region15: #{tpu_custom_call.1} parent=11 // pred_region
          _
        $region16: #{tpu_custom_call.1} parent=11 // pred_fallthru
          _
        // Predicated region
        $region17: #{tpu_custom_call.1} parent=11 // pred_check
          %p235 = pneg %p86
        $region18: #{tpu_custom_call.1} parent=11 // pred_check_branch
          %237 = sbr.rel (%p235) target = $region20
        $region19: #{tpu_custom_call.1} parent=11 // pred_region
          _
        $region20: #{tpu_custom_call.1} parent=11 // pred_fallthru
          _
        // Predicated region
        $region21: #{tpu_custom_call.1} parent=11 // pred_check
          %p238 = pneg %p107
        $region22: #{tpu_custom_call.1} parent=11 // pred_check_branch
          %240 = sbr.rel (%p238) target = $region24
        $region23: #{tpu_custom_call.1} parent=11 // pred_region
          _
        $region24: #{tpu_custom_call.1} parent=11 // pred_fallthru
          _
        // Predicated region
        $region25: #{tpu_custom_call.1} parent=11 // pred_check
          %p241 = pneg %p128
        $region26: #{tpu_custom_call.1} parent=11 // pred_check_branch
          %243 = sbr.rel (%p241) target = $region28
        $region27: #{tpu_custom_call.1} parent=11 // pred_region
          _
        $region28: #{tpu_custom_call.1} parent=11 // pred_fallthru
          _
        // Predicated region
        $region29: #{tpu_custom_call.1} parent=11 // pred_check
          %p244 = pneg %p149
        $region30: #{tpu_custom_call.1} parent=11 // pred_check_branch
          %246 = sbr.rel (%p244) target = $region32
        $region31: #{tpu_custom_call.1} parent=11 // pred_region
          _
        $region32: #{tpu_custom_call.1} parent=11 // pred_fallthru
          _
        // Predicated region
        $region33: #{tpu_custom_call.1} parent=11 // pred_check
          %p247 = pneg %p170
        $region34: #{tpu_custom_call.1} parent=11 // pred_check_branch
          %249 = sbr.rel (%p247) target = $region36
        $region35: #{tpu_custom_call.1} parent=11 // pred_region
          %s251 = ssub.s32 8192, 8192
          %252 = vsyncadd [#allocation3], %s251
          %s253 = sshll.u32 [#allocation2], 4
          %s254 = int_to_ptr.vmem [resolvable:$true] %s253
          %259 = dma.hbm_to_vmem [thread:$0]  %s6, 8192, %s254, [#allocation3], 256, 256, 16
        $region36: #{tpu_custom_call.1} parent=11 // pred_fallthru
          _
        // Predicated region
        $region37: #{tpu_custom_call.1} parent=11 // pred_check
          %p260 = pneg %p191
        $region38: #{tpu_custom_call.1} parent=11 // pred_check_branch
          %262 = sbr.rel (%p260) target = $region40
        $region39: #{tpu_custom_call.1} parent=11 // pred_region
          _
        $region40: #{tpu_custom_call.1} parent=11 // pred_fallthru
          _
      $region12: #{tpu_custom_call.1} parent=5 // pred_fallthru
        _
      %p263 = scmp.lt.s32.totalorder %s18, 2
      // Predicated region
      $region41: #{tpu_custom_call.1} parent=5 // pred_check
        %p264 = pneg %p263
      $region42: #{tpu_custom_call.1} parent=5 // pred_check_branch
        %266 = sbr.rel (%p264) target = $region44
      $region43: #{tpu_custom_call.1} parent=5 // pred_region
        // Predicated region
        $region45: #{tpu_custom_call.1} parent=43 // pred_check
          %p267 = pneg %p38
        $region46: #{tpu_custom_call.1} parent=43 // pred_check_branch
          %269 = sbr.rel (%p267) target = $region48
        $region47: #{tpu_custom_call.1} parent=43 // pred_region
          %s270 = smul.u32 2, %s18
          %p271 = scmp.lt.s32.totalorder %s270, 3
          %s272 = scalar_select %p271, %s270, 3
          %s273 = smul.addr %s272, 4
          %s274 = scalar_lea.vmem %s0, %s273
          %s275 = smul.u32 2, %s18
        $region48: #{tpu_custom_call.1} parent=43 // pred_fallthru
          _
      $region44: #{tpu_custom_call.1} parent=5 // pred_fallthru
        _
      %p276 = scmp.le.s32.totalorder 1, %s18
      %p277 = scmp.lt.s32.totalorder %s18, 3
      %p278 = pnand %p276, %p277
      %p279 = pneg %p278
      // Predicated region
      $region49: #{tpu_custom_call.1} parent=5 // pred_check
        _
      $region50: #{tpu_custom_call.1} parent=5 // pred_check_branch
        %281 = sbr.rel (%p278) target = $region52
      $region51: #{tpu_custom_call.1} parent=5 // pred_region
        %s282 = ssub.s32 %s18, 1
        // Predicated region
        $region53: #{tpu_custom_call.1} parent=51 // pred_check
          %p283 = pneg %p170
        $region54: #{tpu_custom_call.1} parent=51 // pred_check_branch
          %285 = sbr.rel (%p283) target = $region56
        $region55: #{tpu_custom_call.1} parent=51 // pred_region
          %286 = dma.done [#allocation3], 8192
        $region56: #{tpu_custom_call.1} parent=51 // pred_fallthru
          _
        %s287 = smul.u32 2, %s23
        %p288 = scmp.lt.s32.totalorder %s287, 3
        %s289 = scalar_select %p288, %s287, 3
        %s290 = smul.addr %s289, 4
        %s291 = scalar_lea.vmem %s0, %s290
        %p292 = pneg %p44
        %p293 = pneg %p41
        %p294 = pneg %p65
        %p295 = pneg %p62
        %p296 = pneg %p86
        %p297 = pneg %p83
        %p298 = pneg %p107
        %p299 = pneg %p104
        %p300 = pneg %p128
        %p301 = pneg %p125
        %p302 = pneg %p149
        %p303 = pneg %p146
        %p304 = pneg %p170
        %p305 = pneg %p167
        %p306 = pneg %p191
        %p307 = pneg %p188
        %p308 = pneg %p217
        %p309 = pneg %p214
        %s310 = sand.u32 %s204, 1
        %s311 = scalar_lea.sflag [#allocation4], %s310
        %s312 = sand.u32 %s204, 1
        %s313 = smul.addr %s312, 512
        %s314 = scalar_lea.vmem [#allocation5], %s313
        %s315 = smul.u32 2, %s23
        %p316 = scmp.lt.s32.totalorder %s315, 3
        %s317 = scalar_select %p316, %s315, 3
        %s318 = smul.addr %s317, 4
        %s319 = scalar_lea.vmem %s0, %s318
        %s320 = smul.u32 2, %s23
        %v321 = vld [vmem:[%s319] sm:$0x77]
        %v322 = vld [vmem:[%s1] sm:$0xff]
        %v323 = vld [vmem:[%s2] sm:$0xff]
        %v324 = vld [vmem:[%s3] sm:$0xff]
        %v325 = vld [vmem:[%s4] sm:$0x1]
        %v326 = vld [vmem:[%s5] sm:$0xff]
        %v327 = vld [vmem:[%s5 + $0x8] sm:$0xff]
        %v328 = vld [vmem:[%s5 + $0x10] sm:$0xff]
        %v329 = vld [vmem:[%s5 + $0x18] sm:$0xff]
        %v330 = vld [vmem:[#allocation2] sm:$0xff]
        %v331 = vld [vmem:[#allocation2 + $0x8] sm:$0xff]
        %v332 = vld [vmem:[#allocation2 + $0x10] sm:$0xff]
        %v333 = vld [vmem:[#allocation2 + $0x18] sm:$0xff]
        %v334 = vld [vmem:[#allocation2 + $0x20] sm:$0xff]
        %v335 = vld [vmem:[#allocation2 + $0x28] sm:$0xff]
        %v336 = vld [vmem:[#allocation2 + $0x30] sm:$0xff]
        %v337 = vld [vmem:[#allocation2 + $0x38] sm:$0xff]
        %v338 = vld [vmem:[#allocation2 + $0x40] sm:$0xff]
        %v339 = vld [vmem:[#allocation2 + $0x48] sm:$0xff]
        %v340 = vld [vmem:[#allocation2 + $0x50] sm:$0xff]
        %v341 = vld [vmem:[#allocation2 + $0x58] sm:$0xff]
        %v342 = vld [vmem:[#allocation2 + $0x60] sm:$0xff]
        %v343 = vld [vmem:[#allocation2 + $0x68] sm:$0xff]
        %v344 = vld [vmem:[#allocation2 + $0x70] sm:$0xff]
        %v345 = vld [vmem:[#allocation2 + $0x78] sm:$0xff]
        %v346 = vld [vmem:[#allocation2 + $0x80] sm:$0xff]
        %v347 = vld [vmem:[#allocation2 + $0x88] sm:$0xff]
        %v348 = vld [vmem:[#allocation2 + $0x90] sm:$0xff]
        %v349 = vld [vmem:[#allocation2 + $0x98] sm:$0xff]
        %v350 = vld [vmem:[#allocation2 + $0xa0] sm:$0xff]
        %v351 = vld [vmem:[#allocation2 + $0xa8] sm:$0xff]
        %v352 = vld [vmem:[#allocation2 + $0xb0] sm:$0xff]
        %v353 = vld [vmem:[#allocation2 + $0xb8] sm:$0xff]
        %v354 = vld [vmem:[#allocation2 + $0xc0] sm:$0xff]
        %v355 = vld [vmem:[#allocation2 + $0xc8] sm:$0xff]
        %v356 = vld [vmem:[#allocation2 + $0xd0] sm:$0xff]
        %v357 = vld [vmem:[#allocation2 + $0xd8] sm:$0xff]
        %v358 = vld [vmem:[#allocation2 + $0xe0] sm:$0xff]
        %v359 = vld [vmem:[#allocation2 + $0xe8] sm:$0xff]
        %v360 = vld [vmem:[#allocation2 + $0xf0] sm:$0xff]
        %v361 = vld [vmem:[#allocation2 + $0xf8] sm:$0xff]
        %v362 = vld [vmem:[#allocation2 + $0x100] sm:$0xff]
        %v363 = vld [vmem:[#allocation2 + $0x108] sm:$0xff]
        %v364 = vld [vmem:[#allocation2 + $0x110] sm:$0xff]
        %v365 = vld [vmem:[#allocation2 + $0x118] sm:$0xff]
        %v366 = vld [vmem:[#allocation2 + $0x120] sm:$0xff]
        %v367 = vld [vmem:[#allocation2 + $0x128] sm:$0xff]
        %v368 = vld [vmem:[#allocation2 + $0x130] sm:$0xff]
        %v369 = vld [vmem:[#allocation2 + $0x138] sm:$0xff]
        %v370 = vld [vmem:[#allocation2 + $0x140] sm:$0xff]
        %v371 = vld [vmem:[#allocation2 + $0x148] sm:$0xff]
        %v372 = vld [vmem:[#allocation2 + $0x150] sm:$0xff]
        %v373 = vld [vmem:[#allocation2 + $0x158] sm:$0xff]
        %v374 = vld [vmem:[#allocation2 + $0x160] sm:$0xff]
        %v375 = vld [vmem:[#allocation2 + $0x168] sm:$0xff]
        %v376 = vld [vmem:[#allocation2 + $0x170] sm:$0xff]
        %v377 = vld [vmem:[#allocation2 + $0x178] sm:$0xff]
        %v378 = vld [vmem:[#allocation2 + $0x180] sm:$0xff]
        %v379 = vld [vmem:[#allocation2 + $0x188] sm:$0xff]
        %v380 = vld [vmem:[#allocation2 + $0x190] sm:$0xff]
        %v381 = vld [vmem:[#allocation2 + $0x198] sm:$0xff]
        %v382 = vld [vmem:[#allocation2 + $0x1a0] sm:$0xff]
        %v383 = vld [vmem:[#allocation2 + $0x1a8] sm:$0xff]
        %v384 = vld [vmem:[#allocation2 + $0x1b0] sm:$0xff]
        %v385 = vld [vmem:[#allocation2 + $0x1b8] sm:$0xff]
        %v386 = vld [vmem:[#allocation2 + $0x1c0] sm:$0xff]
        %v387 = vld [vmem:[#allocation2 + $0x1c8] sm:$0xff]
        %v388 = vld [vmem:[#allocation2 + $0x1d0] sm:$0xff]
        %v389 = vld [vmem:[#allocation2 + $0x1d8] sm:$0xff]
        %v390 = vld [vmem:[#allocation2 + $0x1e0] sm:$0xff]
        %v391 = vld [vmem:[#allocation2 + $0x1e8] sm:$0xff]
        %v392 = vld [vmem:[#allocation2 + $0x1f0] sm:$0xff]
        %v393 = vld [vmem:[#allocation2 + $0x1f8] sm:$0xff]
        %v394 = vld [vmem:[%s7] sm:$0xff]
        %v395 = vld [vmem:[%s7 + $0x8] sm:$0xff]
        %v396 = vld [vmem:[%s7 + $0x10] sm:$0xff]
        %v397 = vld [vmem:[%s7 + $0x18] sm:$0xff]
        %v398 = vld [vmem:[%s7 + $0x20] sm:$0xff]
        %v399 = vld [vmem:[%s7 + $0x28] sm:$0xff]
        %v400 = vld [vmem:[%s7 + $0x30] sm:$0xff]
        %v401 = vld [vmem:[%s7 + $0x38] sm:$0xff]
        %v402 = vld [vmem:[%s7 + $0x40] sm:$0xff]
        %v403 = vld [vmem:[%s7 + $0x48] sm:$0xff]
        %v404 = vld [vmem:[%s7 + $0x50] sm:$0xff]
        %v405 = vld [vmem:[%s7 + $0x58] sm:$0xff]
        %v406 = vld [vmem:[%s7 + $0x60] sm:$0xff]
        %v407 = vld [vmem:[%s7 + $0x68] sm:$0xff]
        %v408 = vld [vmem:[%s7 + $0x70] sm:$0xff]
        %v409 = vld [vmem:[%s7 + $0x78] sm:$0xff]
        %v410 = vld [vmem:[%s7 + $0x80] sm:$0xff]
        %v411 = vld [vmem:[%s7 + $0x88] sm:$0xff]
        %v412 = vld [vmem:[%s7 + $0x90] sm:$0xff]
        %v413 = vld [vmem:[%s7 + $0x98] sm:$0xff]
        %v414 = vld [vmem:[%s7 + $0xa0] sm:$0xff]
        %v415 = vld [vmem:[%s7 + $0xa8] sm:$0xff]
        %v416 = vld [vmem:[%s7 + $0xb0] sm:$0xff]
        %v417 = vld [vmem:[%s7 + $0xb8] sm:$0xff]
        %v418 = vld [vmem:[%s7 + $0xc0] sm:$0xff]
        %v419 = vld [vmem:[%s7 + $0xc8] sm:$0xff]
        %v420 = vld [vmem:[%s7 + $0xd0] sm:$0xff]
        %v421 = vld [vmem:[%s7 + $0xd8] sm:$0xff]
        %v422 = vld [vmem:[%s7 + $0xe0] sm:$0xff]
        %v423 = vld [vmem:[%s7 + $0xe8] sm:$0xff]
        %v424 = vld [vmem:[%s7 + $0xf0] sm:$0xff]
        %v425 = vld [vmem:[%s7 + $0xf8] sm:$0xff]
        %427 = vset.pattern.permute.xlu0 0
        %428 = vperm.xlu0 %427, %v322
        %v429 = vpop.permute.xlu0 %428
        %v432 = vlaneseq
        %v433 = vshrl.u32 %v432, 7
        %v434 = vsub.s32 0, %v433
        %v435 = vrot.slane %v321, %v434
        %v436 = vlaneseq
        %v437 = vshrl.u32 %v436, 7
        %v438 = vsub.s32 4, %v437
        %v439 = vrot.slane %v321, %v438
        %v442 = vlaneseq
        %v443 = vshrl.u32 %v442, 7
        %v444 = vsub.s32 0, %v443
        %v445 = vrot.slane %v435, %v444
        %v446 = vlaneseq
        %v447 = vshrl.u32 %v446, 7
        %v448 = vsub.s32 0, %v447
        %v449 = vrot.slane %v439, %v448
        %v450 = vmul.f32 %v429, %v445
        %v451 = vmul.f32 %v429, %v449
        %452 = vset.pattern.permute.xlu0 1
        %453 = vperm.xlu0 %452, %v322
        %v454 = vpop.permute.xlu0 %453
        %v456 = vlaneseq
        %v457 = vshrl.u32 %v456, 7
        %v458 = vsub.s32 1, %v457
        %v459 = vrot.slane %v321, %v458
        %v460 = vlaneseq
        %v461 = vshrl.u32 %v460, 7
        %v462 = vsub.s32 5, %v461
        %v463 = vrot.slane %v321, %v462
        %v466 = vlaneseq
        %v467 = vshrl.u32 %v466, 7
        %v468 = vsub.s32 1, %v467
        %v469 = vrot.slane %v459, %v468
        %v470 = vlaneseq
        %v471 = vshrl.u32 %v470, 7
        %v472 = vsub.s32 1, %v471
        %v473 = vrot.slane %v463, %v472
        %v474 = vmul.f32 %v454, %v469
        %v475 = vmul.f32 %v454, %v473
        %v476 = vadd.f32 %v450, %v474
        %v477 = vadd.f32 %v451, %v475
        %478 = vset.pattern.permute.xlu0 2
        %479 = vperm.xlu0 %478, %v322
        %v480 = vpop.permute.xlu0 %479
        %v482 = vlaneseq
        %v483 = vshrl.u32 %v482, 7
        %v484 = vsub.s32 2, %v483
        %v485 = vrot.slane %v321, %v484
        %v486 = vlaneseq
        %v487 = vshrl.u32 %v486, 7
        %v488 = vsub.s32 6, %v487
        %v489 = vrot.slane %v321, %v488
        %v492 = vlaneseq
        %v493 = vshrl.u32 %v492, 7
        %v494 = vsub.s32 2, %v493
        %v495 = vrot.slane %v485, %v494
        %v496 = vlaneseq
        %v497 = vshrl.u32 %v496, 7
        %v498 = vsub.s32 2, %v497
        %v499 = vrot.slane %v489, %v498
        %v500 = vmul.f32 %v480, %v495
        %v501 = vmul.f32 %v480, %v499
        %v502 = vadd.f32 %v476, %v500
        %v503 = vadd.f32 %v477, %v501
        %505 = vset.pattern.permute.xlu0 0
        %506 = vperm.xlu0 %505, %v323
        %v507 = vpop.permute.xlu0 %506
        %v509 = vadd.f32 %v502, %v507
        %v510 = vadd.f32 %v503, %v507
        %v511 = vmax.f32 %v509, 0.0
        %v512 = vmax.f32 %v510, 0.0
        %v513 = vlaneseq
        %v514 = vand.u32 %v513, 127
        %v515 = vadd.f32 %v511, %v512
        %516 = vadd.xlane.f32.xlu0 %v515
        %v517 = vpop.xlane.xlu0 %516
        %v518 = vrcp.pop 256.0
        %v519 = vmul.f32 %v517, %v518
        %v520 = vmul.f32 %v519, %v324
        %vm521 = vcmask 80896
        %v522 = vsel %vm521, %v520, 0.0
        %v523 = vrot.slane %v522, 4
        %v524 = vadd.f32 %v522, %v523
        %v525 = vrot.slane %v524, 2
        %v526 = vadd.f32 %v524, %v525
        %v527 = vrot.slane %v526, 1
        %v528 = vadd.f32 %v526, %v527
        %v529 = vadd.f32 %v528, %v325
        %vm530 = vcmask 73728
        %v531 = vsel %vm530, %v529, -inf
        %532 = vmax.xlane.f32.xlu0 %v531
        %v533 = vpop.xlane.xlu0 %532
        %vm534 = vcmp.ge.f32.partialorder %v529, %v533
        %v535 = vsel %vm534, %v514, 10
        %v536 = vsel %vm530, %v535, 2147483647
        %v537 = vand.u32 %v536, 65535
        %v538 = vshra.s32 %v536, 16
        %v539 = vcvt.s32.f32 %v537
        %v540 = vcvt.s32.f32 %v538
        %541 = vmin.xlane.f32.xlu0 %v540
        %v542 = vpop.xlane.xlu0 %541
        %vm543 = vcmp.eq.f32.partialorder %v540, %v542
        %v544 = vsel %vm543, %v539, inf
        %545 = vmin.xlane.f32.xlu0 %v544
        %v546 = vpop.xlane.xlu0 %545
        %v547 = vcvt.f32.s32 %v546
        %v548 = vcvt.f32.s32 %v542
        %v549 = vshll.u32 %v548, 16
        %v550 = vadd.s32 %v549, %v547
        %v551 = vrot.slane %v550, 4
        %vm552 = vcmp.lt.s32.totalorder %v550, %v551
        %v553 = vsel %vm552, %v550, %v551
        %v554 = vrot.slane %v553, 2
        %vm555 = vcmp.lt.s32.totalorder %v553, %v554
        %v556 = vsel %vm555, %v553, %v554
        %v557 = vrot.slane %v556, 1
        %vm558 = vcmp.lt.s32.totalorder %v556, %v557
        %v559 = vsel %vm558, %v556, %v557
        %s560 = vtos %v559
        %v561 = vstv %s560
        %vm562 = vcmp.eq.s32.totalorder %v514, %v561
        %v563 = vsel %vm562, 1, 0
        %vm564 = vcmp.eq.s32.totalorder %v563, 1
        %v565 = vsel %vm564, %v324, 0.0
        %v566 = vsel %vm521, %v565, 0.0
        %567 = vadd.xlane.f32.xlu0 %v566
        %v568 = vpop.xlane.xlu0 %567
        %v569 = vmul.f32 %v511, %v568
        %v570 = vmul.f32 %v512, %v568
        %v571 = vrot.slane %v569, 4
        %v572 = vadd.f32 %v569, %v571
        %v573 = vrot.slane %v572, 2
        %v574 = vadd.f32 %v572, %v573
        %v575 = vrot.slane %v574, 1
        %v576 = vadd.f32 %v574, %v575
        %v577 = vrot.slane %v570, 4
        %v578 = vadd.f32 %v570, %v577
        %v579 = vrot.slane %v578, 2
        %v580 = vadd.f32 %v578, %v579
        %v581 = vrot.slane %v580, 1
        %v582 = vadd.f32 %v580, %v581
        %v583 = vmax.f32 %v576, 0.0
        %v584 = vmax.f32 %v582, 0.0
        %v585 = vmin.f32 %v583, %v584
        %586 = vmin.xlane.f32.xlu0 %v585
        %v587 = vpop.xlane.xlu0 %586
        %s588 = vtos %v587
        %v589 = vmax.f32 %v583, %v584
        %590 = vmax.xlane.f32.xlu0 %v589
        %v591 = vpop.xlane.xlu0 %590
        %s592 = vtos %v591
        %s593 = ssub.f32 %s592, %s588
        %s594 = sadd.f32 %s593, 1e-08
        %v595 = vstv %s594
        %v596 = vrcp.pop %v595
        %s597 = vtos %v596
        %v598 = vstv %s588
        %v599 = vsub.f32 %v583, %v598
        %v600 = vsub.f32 %v584, %v598
        %v601 = vstv %s597
        %v602 = vmul.f32 %v599, %v601
        %v603 = vmul.f32 %v600, %v601
        %v604 = vmul.f32 %v326, %v602
        %v605 = vmul.f32 %v327, %v603
        %v606 = vmul.f32 %v328, %v602
        %v607 = vmul.f32 %v329, %v603
        %608 = vmatprep.subr.mxu0 %v361
        %609 = vmatpush1.msra.mxu0 %v360
        %610 = vmatprep.subr.mxu0 %v359
        %611 = vmatpush1.msra.mxu0 %v358
        %612 = vmatprep.subr.mxu0 %v357
        %613 = vmatpush1.msra.mxu0 %v356
        %614 = vmatprep.subr.mxu0 %v355
        %615 = vmatpush1.msra.mxu0 %v354
        %616 = vmatprep.subr.mxu0 %v353
        %617 = vmatpush1.msra.mxu0 %v352
        %618 = vmatprep.subr.mxu0 %v351
        %619 = vmatpush1.msra.mxu0 %v350
        %620 = vmatprep.subr.mxu0 %v349
        %621 = vmatpush1.msra.mxu0 %v348
        %622 = vmatprep.subr.mxu0 %v347
        %623 = vmatpush1.msra.mxu0 %v346
        %624 = vmatprep.subr.mxu0 %v345
        %625 = vmatpush1.msra.mxu0 %v344
        %626 = vmatprep.subr.mxu0 %v343
        %627 = vmatpush1.msra.mxu0 %v342
        %628 = vmatprep.subr.mxu0 %v341
        %629 = vmatpush1.msra.mxu0 %v340
        %630 = vmatprep.subr.mxu0 %v339
        %631 = vmatpush1.msra.mxu0 %v338
        %632 = vmatprep.subr.mxu0 %v337
        %633 = vmatpush1.msra.mxu0 %v336
        %634 = vmatprep.subr.mxu0 %v335
        %635 = vmatpush1.msra.mxu0 %v334
        %636 = vmatprep.subr.mxu0 %v333
        %637 = vmatpush1.msra.mxu0 %v332
        %638 = vmatprep.subr.mxu0 %v331
        %639 = vmatpush1.msra.mxu0 %v330
        %640 = vmatprep.subr.mxu0 %v393
        %641 = vmatpush2.msra.mxu0 %v392
        %642 = vmatprep.subr.mxu0 %v391
        %643 = vmatpush2.msra.mxu0 %v390
        %644 = vmatprep.subr.mxu0 %v389
        %645 = vmatpush2.msra.mxu0 %v388
        %646 = vmatprep.subr.mxu0 %v387
        %647 = vmatpush2.msra.mxu0 %v386
        %648 = vmatprep.subr.mxu0 %v385
        %649 = vmatpush2.msra.mxu0 %v384
        %650 = vmatprep.subr.mxu0 %v383
        %651 = vmatpush2.msra.mxu0 %v382
        %652 = vmatprep.subr.mxu0 %v381
        %653 = vmatpush2.msra.mxu0 %v380
        %654 = vmatprep.subr.mxu0 %v379
        %655 = vmatpush2.msra.mxu0 %v378
        %656 = vmatprep.subr.mxu0 %v377
        %657 = vmatpush2.msra.mxu0 %v376
        %658 = vmatprep.subr.mxu0 %v375
        %659 = vmatpush2.msra.mxu0 %v374
        %660 = vmatprep.subr.mxu0 %v373
        %661 = vmatpush2.msra.mxu0 %v372
        %662 = vmatprep.subr.mxu0 %v371
        %663 = vmatpush2.msra.mxu0 %v370
        %664 = vmatprep.subr.mxu0 %v369
        %665 = vmatpush2.msra.mxu0 %v368
        %666 = vmatprep.subr.mxu0 %v367
        %667 = vmatpush2.msra.mxu0 %v366
        %668 = vmatprep.subr.mxu0 %v365
        %669 = vmatpush2.msra.mxu0 %v364
        %670 = vmatprep.subr.mxu0 %v363
        %671 = vmatpush2.msra.mxu0 %v362
        %672 = vmatprep.mubr.f32.mxu0 %v605
        %673 = vmatmul.mubr.f32.gmra.mxu0 %v604
        %v674 = vpop.f32.mrf.mxu0
        %v675 = vadd.f32 0.0, %v674
        %v676 = vpop.f32.mrf.mxu0
        %v677 = vadd.f32 0.0, %v676
        %678 = vmatprep.mubr.f32.mxu0 %v607
        %679 = vmatmul.mubr.f32.gmra.mxu0 %v606
        %v680 = vpop.f32.mrf.mxu0
        %v681 = vadd.f32 0.0, %v680
        %v682 = vpop.f32.mrf.mxu0
        %v683 = vadd.f32 0.0, %v682
        %684 = vdwg.mxu0
        %vm685 = vcmask 130048
        %v687 = vsel %vm685, %v394, 0
        %v690 = vsel %vm685, %v395, 0
        %v693 = vsel %vm685, %v396, 0
        %v696 = vsel %vm685, %v397, 0
        %v699 = vsel %vm685, %v398, 0
        %v702 = vsel %vm685, %v399, 0
        %v705 = vsel %vm685, %v400, 0
        %v708 = vsel %vm685, %v401, 0
        %v711 = vsel %vm685, %v402, 0
        %v714 = vsel %vm685, %v403, 0
        %v717 = vsel %vm685, %v404, 0
        %v720 = vsel %vm685, %v405, 0
        %v723 = vsel %vm685, %v406, 0
        %v726 = vsel %vm685, %v407, 0
        %v729 = vsel %vm685, %v408, 0
        %v732 = vsel %vm685, %v409, 0
        %v735 = vsel %vm685, %v410, 0
        %v738 = vsel %vm685, %v411, 0
        %v741 = vsel %vm685, %v412, 0
        %v744 = vsel %vm685, %v413, 0
        %v747 = vsel %vm685, %v414, 0
        %v750 = vsel %vm685, %v415, 0
        %v753 = vsel %vm685, %v416, 0
        %v756 = vsel %vm685, %v417, 0
        %v759 = vsel %vm685, %v418, 0
        %v762 = vsel %vm685, %v419, 0
        %v765 = vsel %vm685, %v420, 0
        %v768 = vsel %vm685, %v421, 0
        %v771 = vsel %vm685, %v422, 0
        %v774 = vsel %vm685, %v423, 0
        %v777 = vsel %vm685, %v424, 0
        %v780 = vsel %vm685, %v425, 0
        %782 = vmatprep.subr.mxu0 0.0
        %783 = vmatpush1.msra.mxu0 0.0
        %784 = vmatprep.subr.mxu0 0.0
        %785 = vmatpush1.msra.mxu0 0.0
        %786 = vmatprep.subr.mxu0 0.0
        %787 = vmatpush1.msra.mxu0 0.0
        %788 = vmatprep.subr.mxu0 0.0
        %789 = vmatpush1.msra.mxu0 0.0
        %790 = vmatprep.subr.mxu0 0.0
        %791 = vmatpush1.msra.mxu0 0.0
        %792 = vmatprep.subr.mxu0 0.0
        %793 = vmatpush1.msra.mxu0 0.0
        %794 = vmatprep.subr.mxu0 0.0
        %795 = vmatpush1.msra.mxu0 0.0
        %796 = vmatprep.subr.mxu0 0.0
        %797 = vmatpush1.msra.mxu0 0.0
        %798 = vmatprep.subr.mxu0 0.0
        %799 = vmatpush1.msra.mxu0 0.0
        %800 = vmatprep.subr.mxu0 0.0
        %801 = vmatpush1.msra.mxu0 0.0
        %802 = vmatprep.subr.mxu0 0.0
        %803 = vmatpush1.msra.mxu0 0.0
        %804 = vmatprep.subr.mxu0 0.0
        %805 = vmatpush1.msra.mxu0 0.0
        %806 = vmatprep.subr.mxu0 0.0
        %807 = vmatpush1.msra.mxu0 0.0
        %808 = vmatprep.subr.mxu0 0.0
        %809 = vmatpush1.msra.mxu0 0.0
        %810 = vmatprep.subr.mxu0 %v683
        %811 = vmatpush1.msra.mxu0 %v681
        %812 = vmatprep.subr.mxu0 %v677
        %813 = vmatpush1.msra.mxu0 %v675
        %814 = vmatprep.subr.mxu0 0.0
        %815 = vmatpush2.msra.mxu0 0.0
        %816 = vmatprep.subr.mxu0 0.0
        %817 = vmatpush2.msra.mxu0 0.0
        %818 = vmatprep.subr.mxu0 0.0
        %819 = vmatpush2.msra.mxu0 0.0
        %820 = vmatprep.subr.mxu0 0.0
        %821 = vmatpush2.msra.mxu0 0.0
        %822 = vmatprep.subr.mxu0 0.0
        %823 = vmatpush2.msra.mxu0 0.0
        %824 = vmatprep.subr.mxu0 0.0
        %825 = vmatpush2.msra.mxu0 0.0
        %826 = vmatprep.subr.mxu0 0.0
        %827 = vmatpush2.msra.mxu0 0.0
        %828 = vmatprep.subr.mxu0 0.0
        %829 = vmatpush2.msra.mxu0 0.0
        %830 = vmatprep.subr.mxu0 0.0
        %831 = vmatpush2.msra.mxu0 0.0
        %832 = vmatprep.subr.mxu0 0.0
        %833 = vmatpush2.msra.mxu0 0.0
        %834 = vmatprep.subr.mxu0 0.0
        %835 = vmatpush2.msra.mxu0 0.0
        %836 = vmatprep.subr.mxu0 0.0
        %837 = vmatpush2.msra.mxu0 0.0
        %838 = vmatprep.subr.mxu0 0.0
        %839 = vmatpush2.msra.mxu0 0.0
        %840 = vmatprep.subr.mxu0 0.0
        %841 = vmatpush2.msra.mxu0 0.0
        %842 = vmatprep.subr.mxu0 0.0
        %843 = vmatpush2.msra.mxu0 0.0
        %844 = vmatprep.subr.mxu0 0.0
        %845 = vmatpush2.msra.mxu0 0.0
        %846 = vmatprep.mubr.f32.mxu0 0.0
        %847 = vmatmul.mubr.f32.gmra.mxu0 %v687
        %v848 = vpop.f32.mrf.mxu0
        %v849 = vadd.f32 0.0, %v848
        %v850 = vpop.f32.mrf.mxu0
        %v851 = vadd.f32 0.0, %v850
        %852 = vmatprep.mubr.f32.mxu0 0.0
        %853 = vmatmul.mubr.f32.gmra.mxu0 %v690
        %v854 = vpop.f32.mrf.mxu0
        %v855 = vadd.f32 0.0, %v854
        %v856 = vpop.f32.mrf.mxu0
        %v857 = vadd.f32 0.0, %v856
        %858 = vmatprep.mubr.f32.mxu0 0.0
        %859 = vmatmul.mubr.f32.gmra.mxu0 %v693
        %v860 = vpop.f32.mrf.mxu0
        %v861 = vadd.f32 0.0, %v860
        %v862 = vpop.f32.mrf.mxu0
        %v863 = vadd.f32 0.0, %v862
        %864 = vmatprep.mubr.f32.mxu0 0.0
        %865 = vmatmul.mubr.f32.gmra.mxu0 %v696
        %v866 = vpop.f32.mrf.mxu0
        %v867 = vadd.f32 0.0, %v866
        %v868 = vpop.f32.mrf.mxu0
        %v869 = vadd.f32 0.0, %v868
        %870 = vmatprep.mubr.f32.mxu0 0.0
        %871 = vmatmul.mubr.f32.gmra.mxu0 %v699
        %v872 = vpop.f32.mrf.mxu0
        %v873 = vadd.f32 0.0, %v872
        %v874 = vpop.f32.mrf.mxu0
        %v875 = vadd.f32 0.0, %v874
        %876 = vmatprep.mubr.f32.mxu0 0.0
        %877 = vmatmul.mubr.f32.gmra.mxu0 %v702
        %v878 = vpop.f32.mrf.mxu0
        %v879 = vadd.f32 0.0, %v878
        %v880 = vpop.f32.mrf.mxu0
        %v881 = vadd.f32 0.0, %v880
        %882 = vmatprep.mubr.f32.mxu0 0.0
        %883 = vmatmul.mubr.f32.gmra.mxu0 %v705
        %v884 = vpop.f32.mrf.mxu0
        %v885 = vadd.f32 0.0, %v884
        %v886 = vpop.f32.mrf.mxu0
        %v887 = vadd.f32 0.0, %v886
        %888 = vmatprep.mubr.f32.mxu0 0.0
        %889 = vmatmul.mubr.f32.gmra.mxu0 %v708
        %v890 = vpop.f32.mrf.mxu0
        %v891 = vadd.f32 0.0, %v890
        %v892 = vpop.f32.mrf.mxu0
        %v893 = vadd.f32 0.0, %v892
        %894 = vmatprep.mubr.f32.mxu0 0.0
        %895 = vmatmul.mubr.f32.gmra.mxu0 %v711
        %v896 = vpop.f32.mrf.mxu0
        %v897 = vadd.f32 0.0, %v896
        %v898 = vpop.f32.mrf.mxu0
        %v899 = vadd.f32 0.0, %v898
        %900 = vmatprep.mubr.f32.mxu0 0.0
        %901 = vmatmul.mubr.f32.gmra.mxu0 %v714
        %v902 = vpop.f32.mrf.mxu0
        %v903 = vadd.f32 0.0, %v902
        %v904 = vpop.f32.mrf.mxu0
        %v905 = vadd.f32 0.0, %v904
        %906 = vmatprep.mubr.f32.mxu0 0.0
        %907 = vmatmul.mubr.f32.gmra.mxu0 %v717
        %v908 = vpop.f32.mrf.mxu0
        %v909 = vadd.f32 0.0, %v908
        %v910 = vpop.f32.mrf.mxu0
        %v911 = vadd.f32 0.0, %v910
        %912 = vmatprep.mubr.f32.mxu0 0.0
        %913 = vmatmul.mubr.f32.gmra.mxu0 %v720
        %v914 = vpop.f32.mrf.mxu0
        %v915 = vadd.f32 0.0, %v914
        %v916 = vpop.f32.mrf.mxu0
        %v917 = vadd.f32 0.0, %v916
        %918 = vmatprep.mubr.f32.mxu0 0.0
        %919 = vmatmul.mubr.f32.gmra.mxu0 %v723
        %v920 = vpop.f32.mrf.mxu0
        %v921 = vadd.f32 0.0, %v920
        %v922 = vpop.f32.mrf.mxu0
        %v923 = vadd.f32 0.0, %v922
        %924 = vmatprep.mubr.f32.mxu0 0.0
        %925 = vmatmul.mubr.f32.gmra.mxu0 %v726
        %v926 = vpop.f32.mrf.mxu0
        %v927 = vadd.f32 0.0, %v926
        %v928 = vpop.f32.mrf.mxu0
        %v929 = vadd.f32 0.0, %v928
        %930 = vmatprep.mubr.f32.mxu0 0.0
        %931 = vmatmul.mubr.f32.gmra.mxu0 %v729
        %v932 = vpop.f32.mrf.mxu0
        %v933 = vadd.f32 0.0, %v932
        %v934 = vpop.f32.mrf.mxu0
        %v935 = vadd.f32 0.0, %v934
        %936 = vmatprep.mubr.f32.mxu0 0.0
        %937 = vmatmul.mubr.f32.gmra.mxu0 %v732
        %v938 = vpop.f32.mrf.mxu0
        %v939 = vadd.f32 0.0, %v938
        %v940 = vpop.f32.mrf.mxu0
        %v941 = vadd.f32 0.0, %v940
        %942 = vmatprep.mubr.f32.mxu0 0.0
        %943 = vmatmul.mubr.f32.gmra.mxu0 %v735
        %v944 = vpop.f32.mrf.mxu0
        %v945 = vadd.f32 0.0, %v944
        %v946 = vpop.f32.mrf.mxu0
        %v947 = vadd.f32 0.0, %v946
        %948 = vmatprep.mubr.f32.mxu0 0.0
        %949 = vmatmul.mubr.f32.gmra.mxu0 %v738
        %v950 = vpop.f32.mrf.mxu0
        %v951 = vadd.f32 0.0, %v950
        %v952 = vpop.f32.mrf.mxu0
        %v953 = vadd.f32 0.0, %v952
        %954 = vmatprep.mubr.f32.mxu0 0.0
        %955 = vmatmul.mubr.f32.gmra.mxu0 %v741
        %v956 = vpop.f32.mrf.mxu0
        %v957 = vadd.f32 0.0, %v956
        %v958 = vpop.f32.mrf.mxu0
        %v959 = vadd.f32 0.0, %v958
        %960 = vmatprep.mubr.f32.mxu0 0.0
        %961 = vmatmul.mubr.f32.gmra.mxu0 %v744
        %v962 = vpop.f32.mrf.mxu0
        %v963 = vadd.f32 0.0, %v962
        %v964 = vpop.f32.mrf.mxu0
        %v965 = vadd.f32 0.0, %v964
        %966 = vmatprep.mubr.f32.mxu0 0.0
        %967 = vmatmul.mubr.f32.gmra.mxu0 %v747
        %v968 = vpop.f32.mrf.mxu0
        %v969 = vadd.f32 0.0, %v968
        %v970 = vpop.f32.mrf.mxu0
        %v971 = vadd.f32 0.0, %v970
        %972 = vmatprep.mubr.f32.mxu0 0.0
        %973 = vmatmul.mubr.f32.gmra.mxu0 %v750
        %v974 = vpop.f32.mrf.mxu0
        %v975 = vadd.f32 0.0, %v974
        %v976 = vpop.f32.mrf.mxu0
        %v977 = vadd.f32 0.0, %v976
        %978 = vmatprep.mubr.f32.mxu0 0.0
        %979 = vmatmul.mubr.f32.gmra.mxu0 %v753
        %v980 = vpop.f32.mrf.mxu0
        %v981 = vadd.f32 0.0, %v980
        %v982 = vpop.f32.mrf.mxu0
        %v983 = vadd.f32 0.0, %v982
        %984 = vmatprep.mubr.f32.mxu0 0.0
        %985 = vmatmul.mubr.f32.gmra.mxu0 %v756
        %v986 = vpop.f32.mrf.mxu0
        %v987 = vadd.f32 0.0, %v986
        %v988 = vpop.f32.mrf.mxu0
        %v989 = vadd.f32 0.0, %v988
        %990 = vmatprep.mubr.f32.mxu0 0.0
        %991 = vmatmul.mubr.f32.gmra.mxu0 %v759
        %v992 = vpop.f32.mrf.mxu0
        %v993 = vadd.f32 0.0, %v992
        %v994 = vpop.f32.mrf.mxu0
        %v995 = vadd.f32 0.0, %v994
        %996 = vmatprep.mubr.f32.mxu0 0.0
        %997 = vmatmul.mubr.f32.gmra.mxu0 %v762
        %v998 = vpop.f32.mrf.mxu0
        %v999 = vadd.f32 0.0, %v998
        %v1000 = vpop.f32.mrf.mxu0
        %v1001 = vadd.f32 0.0, %v1000
        %1002 = vmatprep.mubr.f32.mxu0 0.0
        %1003 = vmatmul.mubr.f32.gmra.mxu0 %v765
        %v1004 = vpop.f32.mrf.mxu0
        %v1005 = vadd.f32 0.0, %v1004
        %v1006 = vpop.f32.mrf.mxu0
        %v1007 = vadd.f32 0.0, %v1006
        %1008 = vmatprep.mubr.f32.mxu0 0.0
        %1009 = vmatmul.mubr.f32.gmra.mxu0 %v768
        %v1010 = vpop.f32.mrf.mxu0
        %v1011 = vadd.f32 0.0, %v1010
        %v1012 = vpop.f32.mrf.mxu0
        %v1013 = vadd.f32 0.0, %v1012
        %1014 = vmatprep.mubr.f32.mxu0 0.0
        %1015 = vmatmul.mubr.f32.gmra.mxu0 %v771
        %v1016 = vpop.f32.mrf.mxu0
        %v1017 = vadd.f32 0.0, %v1016
        %v1018 = vpop.f32.mrf.mxu0
        %v1019 = vadd.f32 0.0, %v1018
        %1020 = vmatprep.mubr.f32.mxu0 0.0
        %1021 = vmatmul.mubr.f32.gmra.mxu0 %v774
        %v1022 = vpop.f32.mrf.mxu0
        %v1023 = vadd.f32 0.0, %v1022
        %v1024 = vpop.f32.mrf.mxu0
        %v1025 = vadd.f32 0.0, %v1024
        %1026 = vmatprep.mubr.f32.mxu0 0.0
        %1027 = vmatmul.mubr.f32.gmra.mxu0 %v777
        %v1028 = vpop.f32.mrf.mxu0
        %v1029 = vadd.f32 0.0, %v1028
        %v1030 = vpop.f32.mrf.mxu0
        %v1031 = vadd.f32 0.0, %v1030
        %1032 = vmatprep.mubr.f32.mxu0 0.0
        %1033 = vmatmul.mubr.f32.gmra.mxu0 %v780
        %v1034 = vpop.f32.mrf.mxu0
        %v1035 = vadd.f32 0.0, %v1034
        %v1036 = vpop.f32.mrf.mxu0
        %v1037 = vadd.f32 0.0, %v1036
        %1038 = vdwg.mxu0
        %1039 = vst [vmem:[%s314] sm:$0xff] %v849
        %1040 = vst [vmem:[%s314 + $0x8] sm:$0xff] %v851
        %1041 = vst [vmem:[%s314 + $0x10] sm:$0xff] %v855
        %1042 = vst [vmem:[%s314 + $0x18] sm:$0xff] %v857
        %1043 = vst [vmem:[%s314 + $0x20] sm:$0xff] %v861
        %1044 = vst [vmem:[%s314 + $0x28] sm:$0xff] %v863
        %1045 = vst [vmem:[%s314 + $0x30] sm:$0xff] %v867
        %1046 = vst [vmem:[%s314 + $0x38] sm:$0xff] %v869
        %1047 = vst [vmem:[%s314 + $0x40] sm:$0xff] %v873
        %1048 = vst [vmem:[%s314 + $0x48] sm:$0xff] %v875
        %1049 = vst [vmem:[%s314 + $0x50] sm:$0xff] %v879
        %1050 = vst [vmem:[%s314 + $0x58] sm:$0xff] %v881
        %1051 = vst [vmem:[%s314 + $0x60] sm:$0xff] %v885
        %1052 = vst [vmem:[%s314 + $0x68] sm:$0xff] %v887
        %1053 = vst [vmem:[%s314 + $0x70] sm:$0xff] %v891
        %1054 = vst [vmem:[%s314 + $0x78] sm:$0xff] %v893
        %1055 = vst [vmem:[%s314 + $0x80] sm:$0xff] %v897
        %1056 = vst [vmem:[%s314 + $0x88] sm:$0xff] %v899
        %1057 = vst [vmem:[%s314 + $0x90] sm:$0xff] %v903
        %1058 = vst [vmem:[%s314 + $0x98] sm:$0xff] %v905
        %1059 = vst [vmem:[%s314 + $0xa0] sm:$0xff] %v909
        %1060 = vst [vmem:[%s314 + $0xa8] sm:$0xff] %v911
        %1061 = vst [vmem:[%s314 + $0xb0] sm:$0xff] %v915
        %1062 = vst [vmem:[%s314 + $0xb8] sm:$0xff] %v917
        %1063 = vst [vmem:[%s314 + $0xc0] sm:$0xff] %v921
        %1064 = vst [vmem:[%s314 + $0xc8] sm:$0xff] %v923
        %1065 = vst [vmem:[%s314 + $0xd0] sm:$0xff] %v927
        %1066 = vst [vmem:[%s314 + $0xd8] sm:$0xff] %v929
        %1067 = vst [vmem:[%s314 + $0xe0] sm:$0xff] %v933
        %1068 = vst [vmem:[%s314 + $0xe8] sm:$0xff] %v935
        %1069 = vst [vmem:[%s314 + $0xf0] sm:$0xff] %v939
        %1070 = vst [vmem:[%s314 + $0xf8] sm:$0xff] %v941
        %1071 = vst [vmem:[%s314 + $0x100] sm:$0xff] %v945
        %1072 = vst [vmem:[%s314 + $0x108] sm:$0xff] %v947
        %1073 = vst [vmem:[%s314 + $0x110] sm:$0xff] %v951
        %1074 = vst [vmem:[%s314 + $0x118] sm:$0xff] %v953
        %1075 = vst [vmem:[%s314 + $0x120] sm:$0xff] %v957
        %1076 = vst [vmem:[%s314 + $0x128] sm:$0xff] %v959
        %1077 = vst [vmem:[%s314 + $0x130] sm:$0xff] %v963
        %1078 = vst [vmem:[%s314 + $0x138] sm:$0xff] %v965
        %1079 = vst [vmem:[%s314 + $0x140] sm:$0xff] %v969
        %1080 = vst [vmem:[%s314 + $0x148] sm:$0xff] %v971
        %1081 = vst [vmem:[%s314 + $0x150] sm:$0xff] %v975
        %1082 = vst [vmem:[%s314 + $0x158] sm:$0xff] %v977
        %1083 = vst [vmem:[%s314 + $0x160] sm:$0xff] %v981
        %1084 = vst [vmem:[%s314 + $0x168] sm:$0xff] %v983
        %1085 = vst [vmem:[%s314 + $0x170] sm:$0xff] %v987
        %1086 = vst [vmem:[%s314 + $0x178] sm:$0xff] %v989
        %1087 = vst [vmem:[%s314 + $0x180] sm:$0xff] %v993
        %1088 = vst [vmem:[%s314 + $0x188] sm:$0xff] %v995
        %1089 = vst [vmem:[%s314 + $0x190] sm:$0xff] %v999
        %1090 = vst [vmem:[%s314 + $0x198] sm:$0xff] %v1001
        %1091 = vst [vmem:[%s314 + $0x1a0] sm:$0xff] %v1005
        %1092 = vst [vmem:[%s314 + $0x1a8] sm:$0xff] %v1007
        %1093 = vst [vmem:[%s314 + $0x1b0] sm:$0xff] %v1011
        %1094 = vst [vmem:[%s314 + $0x1b8] sm:$0xff] %v1013
        %1095 = vst [vmem:[%s314 + $0x1c0] sm:$0xff] %v1017
        %1096 = vst [vmem:[%s314 + $0x1c8] sm:$0xff] %v1019
        %1097 = vst [vmem:[%s314 + $0x1d0] sm:$0xff] %v1023
        %1098 = vst [vmem:[%s314 + $0x1d8] sm:$0xff] %v1025
        %1099 = vst [vmem:[%s314 + $0x1e0] sm:$0xff] %v1029
        %1100 = vst [vmem:[%s314 + $0x1e8] sm:$0xff] %v1031
        %1101 = vst [vmem:[%s314 + $0x1f0] sm:$0xff] %v1035
        %1102 = vst [vmem:[%s314 + $0x1f8] sm:$0xff] %v1037
        %s1103 = sand.u32 %s204, 1
        %s1104 = scalar_lea.sflag [#allocation4], %s1103
        %s1105 = sand.u32 %s204, 1
        %s1106 = smul.addr %s1105, 512
        %s1107 = scalar_lea.vmem [#allocation5], %s1106
        // Predicated region
        $region57: #{tpu_custom_call.1} parent=51 // pred_check
          %p1108 = pneg %p214
        $region58: #{tpu_custom_call.1} parent=51 // pred_check_branch
          %1110 = sbr.rel (%p1108) target = $region60
        $region59: #{tpu_custom_call.1} parent=51 // pred_region
          %s1112 = ssub.s32 8192, 8192
          %1113 = vsyncadd %s1104, %s1112
          %s1114 = smul.addr %s23, 64
          %s1115 = smul.addr %s1114, 128
          %s1116 = scalar_lea.hbm %s8, %s1115
          %s1117 = sshll.u32 %s1107, 4
          %s1118 = int_to_ptr.vmem [resolvable:$true] %s1117
          %1123 = dma.vmem_to_hbm [thread:$0]  %s1118, 8192, %s1116, %s1104, 256, 256, 16
        $region60: #{tpu_custom_call.1} parent=51 // pred_fallthru
          _
      $region52: #{tpu_custom_call.1} parent=5 // pred_fallthru
        _
      %p1124 = scmp.le.s32.totalorder 2, %s18
      // Predicated region
      $region61: #{tpu_custom_call.1} parent=5 // pred_check
        %p1125 = pneg %p1124
      $region62: #{tpu_custom_call.1} parent=5 // pred_check_branch
        %1127 = sbr.rel (%p1125) target = $region64
      $region63: #{tpu_custom_call.1} parent=5 // pred_region
        %s1128 = ssub.s32 %s18, 2
        // Predicated region
        $region65: #{tpu_custom_call.1} parent=63 // pred_check
          %p1129 = pneg %p220
        $region66: #{tpu_custom_call.1} parent=63 // pred_check_branch
          %1131 = sbr.rel (%p1129) target = $region68
        $region67: #{tpu_custom_call.1} parent=63 // pred_region
          %s1132 = sand.u32 %s205, 1
          %s1133 = scalar_lea.sflag [#allocation4], %s1132
          %s1134 = sand.u32 %s205, 1
          %s1135 = smul.addr %s1134, 512
          %s1136 = scalar_lea.vmem [#allocation5], %s1135
          %1137 = dma.done %s1133, 8192
        $region68: #{tpu_custom_call.1} parent=63 // pred_fallthru
          _
      $region64: #{tpu_custom_call.1} parent=5 // pred_fallthru
        _
    $region6: #{tpu_custom_call.1} parent=1 // loop_footer
      %s22 = sadd.s32 1, %s18
    $region7: #{tpu_custom_call.1} parent=1 // loop_footer_branch
      %17 = sbr.rel target = $region3
    $region8: #{tpu_custom_call.1} parent=1 // loop_exit
      _
    %1138 = vsyncpa [#allocation3], 1
    %s1139 = scalar_lea.sflag [#allocation3], 1
    %1140 = vsyncpa %s1139, 1
    %1141 = vsyncpa [#allocation4], 1
    %s1142 = scalar_lea.sflag [#allocation4], 1
    %1143 = vsyncpa %s1142, 1

</llo_original>
